<compile_context>
chip_gen: v6e
topology: v6e:2x2x1
jax: 0.10.0
libtpu: 0.0.40
codegen_flags: <defaults>
</compile_context>

<pallas_src>
import functools

import jax
import jax.numpy as jnp
from jax import lax
from jax.experimental import pallas as pl
from jax.experimental.pallas import tpu as pltpu


# Above this many columns, switch the rank loop from a static Python unroll to
# a lax.fori_loop (keeps trace/compile time bounded for very large batches).
_RANK_UNROLL_MAX_COLS = 256


def _pick_row_tile(batch, dtype):
    """Largest MXU-friendly row tile that divides the batch.

    128 matches the v5e MXU exactly and fills half the v6e/v7x MXU rows;
    the minimum respects sublane packing (8 rows f32, 16 bf16, 32 int8/fp8).
    A full-array block is always legal as a fallback.
    """
    itemsize = jnp.dtype(dtype).itemsize
    min_rows = {4: 8, 2: 16, 1: 32}.get(itemsize, 8)
    for r in (128, 64, 32, 16, 8):
        if r >= min_rows and batch % r == 0:
            return r
    return batch


def _vmem_limit_bytes(B, D, R, dtype):
    """Explicit scoped-VMEM budget with ~25% headroom (per TensorCore)."""
    item = jnp.dtype(dtype).itemsize
    student = B * D * item * 2          # resident student (worst case 2 buffers)
    tiles = 2 * 2 * R * D * item        # teacher + output tiles, double-buffered
    ssq = 2 * B * 4                     # hoisted squared norms
    temps = 10 * R * B * 4              # dists / rank / masks / iotas (f32, i32)
    est = int((student + tiles + ssq + temps) * 1.25)
    # Floor at the v5e default; cap at the v7x per-TC physical VMEM.
    return max(16 * 1024 * 1024, min(est, 64 * 1024 * 1024))


def _curriculum_kernel(t_ref, s_ref, ssq_ref, neg_ref, *, idx_threshold):
    """One row-tile of CurriculumMining.

    t_ref   : (R, D) teacher row tile (VMEM)
    s_ref   : (B, D) full student matrix (VMEM, resident across steps)
    ssq_ref : (1, B) f32 student squared norms (hoisted to the wrapper)
    neg_ref : (R, D) output tile (negative student images for these rows)
    idx_threshold: static Python int k, 0 <= k <= B-1
    """
    R, D = t_ref.shape
    B = s_ref.shape[0]
    k = idx_threshold

    i0 = pl.multiple_of(pl.program_id(0) * R, R)       # first global row of tile

    t_nat = t_ref[...]                                  # (R, D) native dtype
    s_nat = s_ref[...]                                  # (B, D) native dtype
    st_nat = s_ref[pl.ds(i0, R), :]                     # (R, D) matching student rows

    # ---- pairwise Euclidean distances (torch.cdist, p=2) via gram trick ----
    # 'NT' contraction: no explicit transpose of the (B, D) student matrix.
    gram = lax.dot_general(
        t_nat, s_nat, dimension_numbers=(((1,), (1,)), ((), ())),
        preferred_element_type=jnp.float32)             # (R, B)

    t_f = t_nat.astype(jnp.float32)
    st_f = st_nat.astype(jnp.float32)

    t_sq = jnp.sum(t_f * t_f, axis=-1, keepdims=True)   # (R, 1)
    s_sq = ssq_ref[...]                                  # (1, B) hoisted

    d2 = t_sq + s_sq - 2.0 * gram
    dists = jnp.sqrt(jnp.maximum(d2, 0.0))              # (R, B)

    # ---- diagonal d_ii: exact difference form (cheap per-tile VPU work) ----
    diff = t_f - st_f
    diag = jnp.sqrt(jnp.sum(diff * diff, axis=-1, keepdims=True))   # (R, 1)

    col = lax.broadcasted_iota(jnp.int32, (R, B), 1)            # column index j
    grow = lax.broadcasted_iota(jnp.int32, (R, B), 0) + i0      # global row index
    eye = col == grow

    # ---- hard semi-negative: argmin_j |d_ij - d_ii|, j != i (first index) ---
    abs_diff = jnp.abs(jnp.where(eye, jnp.inf, dists) - diag)   # (R, B)
    min_val = jnp.min(abs_diff, axis=1, keepdims=True)
    hard_semi = jnp.min(jnp.where(abs_diff == min_val, col, B),
                        axis=1, keepdims=True)                  # (R, 1) int32

    # ---- index of k-th largest entry of rev per row (descending, stable) ---
    # rev = dists with the diagonal replaced by -1 (matches the reference).
    # Stable rank counting vectorized over the row tile, (R, B) temporaries
    # only: rank[r, j] = #{j' : rev[r,j'] > rev[r,j]}
    #                  + #{j' < j : rev[r,j'] == rev[r,j]}
    rev = jnp.where(eye, -1.0, dists)                           # (R, B) f32

    if B <= _RANK_UNROLL_MAX_COLS:
        rank = jnp.zeros((R, B), jnp.int32)
        for jp in range(B):                        # static unroll over columns
            v = rev[:, jp:jp + 1]                  # (R, 1), lane-broadcasts below
            beats = jnp.logical_or(
                v > rev, jnp.logical_and(v == rev, col > jp))
            rank = rank + beats.astype(jnp.int32)
    else:
        def body(jp, rank):
            v = jnp.max(jnp.where(col == jp, rev, -jnp.inf),
                        axis=1, keepdims=True)     # (R, 1) column jp of rev
            beats = jnp.logical_or(
                v > rev, jnp.logical_and(v == rev, col > jp))
            return rank + beats.astype(jnp.int32)
        rank = lax.fori_loop(0, B, body, jnp.zeros((R, B), jnp.int32))

    # exactly one column per row has rank == k (stable rank is a permutation)
    neg_idx = jnp.min(jnp.where(rank == k, col, B), axis=1, keepdims=True)

    # ---- final index and gather (one-hot matmul in the input dtype) --------
    fin_idx = jnp.minimum(hard_semi, neg_idx)                   # (R, 1)
    onehot = (col == fin_idx).astype(s_nat.dtype)               # (R, B)
    negative = jnp.dot(onehot, s_nat, preferred_element_type=jnp.float32)
    neg_ref[...] = negative.astype(neg_ref.dtype)


def curriculum_mining(teacher_images, student_images, tau):
    """JAX/Pallas equivalent of CurriculumMining.forward.

    Returns (teacher_images, negative_student_images).
    """
    B, D = teacher_images.shape
    idx_threshold = round(tau * (B - 1)) - 1
    idx_threshold = min(max(idx_threshold, 0), B - 1)

    R = _pick_row_tile(B, student_images.dtype)
    kernel = functools.partial(_curriculum_kernel, idx_threshold=idx_threshold)

    # Hoisted student squared norms: tiny XLA op, passed as a (1, B) f32 input
    # with a constant BlockSpec -- the kernel never re-reduces the full block.
    s_f = student_images.astype(jnp.float32)
    s_sq_row = jnp.sum(s_f * s_f, axis=1, keepdims=True).reshape(1, B)

    compiler_params = pltpu.CompilerParams(
        dimension_semantics=("parallel",),
        vmem_limit_bytes=_vmem_limit_bytes(B, D, R, student_images.dtype),
    )

    def call(student_spec):
        return pl.pallas_call(
            kernel,
            out_shape=jax.ShapeDtypeStruct((B, D), student_images.dtype),
            grid=(B // R,),
            in_specs=[
                pl.BlockSpec((R, D), lambda i: (i, 0)),    # teacher row tile
                student_spec,                               # full student, resident
                pl.BlockSpec((1, B), lambda i: (0, 0)),     # hoisted squared norms
            ],
            out_specs=pl.BlockSpec((R, D), lambda i: (i, 0)),
            compiler_params=compiler_params,
        )(teacher_images, student_images, s_sq_row)

    try:
        # Single-buffer the constant student block: its index_map never
        # changes, so double-buffering only doubles the largest VMEM alloc.
        negative = call(pl.BlockSpec((B, D), lambda i: (0, 0),
                                     pipeline_mode=pl.Buffered(1)))
    except Exception:
        # Pallas/Mosaic without per-block buffer counts: default pipelining.
        negative = call(pl.BlockSpec((B, D), lambda i: (0, 0)))

    return teacher_images, negative


# ---------------------------------------------------------------------------
# Pure-JAX reference (mirrors the PyTorch code) for correctness checking.
# ---------------------------------------------------------------------------
def _reference(teacher, student, tau):
    B, D = teacher.shape
    t = teacher.astype(jnp.float32)
    s = student.astype(jnp.float32)
    dists = jnp.sqrt(
        jnp.maximum(jnp.sum((t[:, None, :] - s[None, :, :]) ** 2, axis=-1), 0.0))
    diag = jnp.diagonal(dists)
    rev = dists - jnp.diag(diag + 1.0)
    sorted_idx = jnp.argsort(-rev, axis=1)            # stable descending order
    k = min(max(round(tau * (B - 1)) - 1, 0), B - 1)
    masked = dists.at[jnp.arange(B), jnp.arange(B)].set(jnp.inf)
    hard_semi = jnp.argmin(jnp.abs(masked - diag[:, None]), axis=1)
    neg_sample_idx = sorted_idx[:, k]
    fin_idx = jnp.minimum(hard_semi, neg_sample_idx)
    return teacher, student[fin_idx]


if __name__ == "__main__":
    key = jax.random.PRNGKey(0)
    k1, k2 = jax.random.split(key)
    B, D = 8, 32
    tau = 0.5

    teacher = jax.random.normal(k1, (B, D), dtype=jnp.float32)
    student = jax.random.normal(k2, (B, D), dtype=jnp.float32)

    t_out, neg_out = curriculum_mining(teacher, student, tau)
    jax.block_until_ready(neg_out)

    t_ref, neg_ref = _reference(teacher, student, tau)
    assert jnp.allclose(t_out, t_ref), "teacher pass-through mismatch"
    assert jnp.allclose(neg_out, neg_ref, rtol=1e-5, atol=1e-5), \
        "negative student images mismatch"

    print("KERNEL_OK")
</pallas_src>

<mosaic_0001>
module attributes {stable_mosaic.version = 11 : i64} {
  func.func @_curriculum_kernel(%arg0: i32, %arg1: memref<8x32xf32, #tpu.memory_space<vmem>>, %arg2: memref<8x32xf32, #tpu.memory_space<vmem>>, %arg3: memref<1x8xf32, #tpu.memory_space<vmem>>, %arg4: memref<8x32xf32, #tpu.memory_space<vmem>>) attributes {dimension_semantics = [#tpu.dimension_semantics<parallel>], iteration_bounds = array<i64: 1>, scalar_prefetch = 0 : i64, scratch_operands = 0 : i64, tpu.core_type = #tpu.core_type<tc>, window_params = [{transform_indices = @transform_0, window_bounds = array<i64: 8, 32>}, {pipeline_mode = #tpu.pipeline_mode<synchronous>, transform_indices = @transform_1, window_bounds = array<i64: 8, 32>}, {pipeline_mode = #tpu.pipeline_mode<synchronous>, transform_indices = @transform_2, window_bounds = array<i64: 1, 8>}, {transform_indices = @transform_3, window_bounds = array<i64: 8, 32>}]} {
    %c8_i32 = arith.constant 8 : i32
    %0 = arith.muli %arg0, %c8_i32 : i32
    %1 = tpu.assume_multiple %0, 8 : i32
    %c0 = arith.constant 0 : index
    %c0_0 = arith.constant 0 : index
    %2 = vector.load %arg1[%c0, %c0_0] : memref<8x32xf32, #tpu.memory_space<vmem>>, vector<8x32xf32>
    %c0_1 = arith.constant 0 : index
    %c0_2 = arith.constant 0 : index
    %3 = vector.load %arg2[%c0_1, %c0_2] : memref<8x32xf32, #tpu.memory_space<vmem>>, vector<8x32xf32>
    %4 = arith.index_cast %1 : i32 to index
    %c0_3 = arith.constant 0 : index
    %5 = vector.load %arg2[%4, %c0_3] : memref<8x32xf32, #tpu.memory_space<vmem>>, vector<8x32xf32>
    %cst = arith.constant dense<0.000000e+00> : vector<8x8xf32>
    %6 = tpu.matmul %2, %3, %cst {dimension_numbers = #tpu.dot_dimension_numbers<[1], [1], [0], [0], [0, 0, 1, 0], [], []>} : vector<8x32xf32>, vector<8x32xf32>, vector<8x8xf32> -> vector<8x8xf32>
    %7 = arith.mulf %2, %2 : vector<8x32xf32>
    %cst_4 = arith.constant dense<0.000000e+00> : vector<8xf32>
    %8 = vector.multi_reduction <add>, %7, %cst_4 [1] : vector<8x32xf32> to vector<8xf32>
    %9 = vector.shape_cast %8 : vector<8xf32> to vector<8x1xf32>
    %c0_5 = arith.constant 0 : index
    %c0_6 = arith.constant 0 : index
    %10 = vector.load %arg3[%c0_5, %c0_6] : memref<1x8xf32, #tpu.memory_space<vmem>>, vector<1x8xf32>
    %11 = vector.broadcast %9 : vector<8x1xf32> to vector<8x8xf32>
    %12 = vector.broadcast %10 : vector<1x8xf32> to vector<8x8xf32>
    %13 = arith.addf %11, %12 : vector<8x8xf32>
    %cst_7 = arith.constant 2.000000e+00 : f32
    %14 = vector.broadcast %cst_7 : f32 to vector<8x8xf32>
    %15 = arith.mulf %14, %6 : vector<8x8xf32>
    %16 = arith.subf %13, %15 : vector<8x8xf32>
    %cst_8 = arith.constant 0.000000e+00 : f32
    %17 = vector.broadcast %cst_8 : f32 to vector<8x8xf32>
    %18 = arith.maximumf %16, %17 : vector<8x8xf32>
    %19 = math.sqrt %18 : vector<8x8xf32>
    %20 = arith.subf %2, %5 : vector<8x32xf32>
    %21 = arith.mulf %20, %20 : vector<8x32xf32>
    %cst_9 = arith.constant dense<0.000000e+00> : vector<8xf32>
    %22 = vector.multi_reduction <add>, %21, %cst_9 [1] : vector<8x32xf32> to vector<8xf32>
    %23 = vector.shape_cast %22 : vector<8xf32> to vector<8x1xf32>
    %24 = math.sqrt %23 : vector<8x1xf32>
    %25 = tpu.iota {dimensions = array<i32: 1>} : vector<8x8xi32>
    %26 = tpu.iota {dimensions = array<i32: 0>} : vector<8x8xi32>
    %27 = vector.broadcast %1 : i32 to vector<8x8xi32>
    %28 = arith.addi %26, %27 : vector<8x8xi32>
    %29 = arith.cmpi eq, %25, %28 : vector<8x8xi32>
    %cst_10 = arith.constant 0x7F800000 : f32
    %30 = vector.broadcast %cst_10 : f32 to vector<8x8xf32>
    %31 = arith.select %29, %30, %19 : vector<8x8xi1>, vector<8x8xf32>
    %32 = vector.broadcast %24 : vector<8x1xf32> to vector<8x8xf32>
    %33 = arith.subf %31, %32 : vector<8x8xf32>
    %34 = math.absf %33 : vector<8x8xf32>
    %cst_11 = arith.constant dense<0x7F800000> : vector<8xf32>
    %35 = vector.multi_reduction <minimumf>, %34, %cst_11 [1] : vector<8x8xf32> to vector<8xf32>
    %36 = vector.shape_cast %35 : vector<8xf32> to vector<8x1xf32>
    %37 = vector.broadcast %36 : vector<8x1xf32> to vector<8x8xf32>
    %38 = arith.cmpf oeq, %34, %37 : vector<8x8xf32>
    %c8_i32_12 = arith.constant 8 : i32
    %39 = vector.broadcast %c8_i32_12 : i32 to vector<8x8xi32>
    %40 = arith.select %38, %25, %39 : vector<8x8xi1>, vector<8x8xi32>
    %cst_13 = arith.constant dense<2147483647> : vector<8xi32>
    %41 = vector.multi_reduction <minsi>, %40, %cst_13 [1] : vector<8x8xi32> to vector<8xi32>
    %42 = vector.shape_cast %41 : vector<8xi32> to vector<8x1xi32>
    %cst_14 = arith.constant -1.000000e+00 : f32
    %43 = vector.broadcast %cst_14 : f32 to vector<8x8xf32>
    %44 = arith.select %29, %43, %19 : vector<8x8xi1>, vector<8x8xf32>
    %c0_i32 = arith.constant 0 : i32
    %45 = vector.broadcast %c0_i32 : i32 to vector<8x8xi32>
    %46 = vector.extract_strided_slice %44 {offsets = [0, 0], sizes = [8, 1], strides = [1, 1]} : vector<8x8xf32> to vector<8x1xf32>
    %47 = vector.broadcast %46 : vector<8x1xf32> to vector<8x8xf32>
    %48 = arith.cmpf ogt, %47, %44 : vector<8x8xf32>
    %49 = vector.broadcast %46 : vector<8x1xf32> to vector<8x8xf32>
    %50 = arith.cmpf oeq, %49, %44 : vector<8x8xf32>
    %c0_i32_15 = arith.constant 0 : i32
    %51 = vector.broadcast %c0_i32_15 : i32 to vector<8x8xi32>
    %52 = arith.cmpi sgt, %25, %51 : vector<8x8xi32>
    %53 = arith.andi %50, %52 : vector<8x8xi1>
    %54 = arith.ori %48, %53 : vector<8x8xi1>
    %55 = arith.extui %54 : vector<8x8xi1> to vector<8x8xi32>
    %56 = arith.addi %45, %55 : vector<8x8xi32>
    %57 = vector.extract_strided_slice %44 {offsets = [0, 1], sizes = [8, 1], strides = [1, 1]} : vector<8x8xf32> to vector<8x1xf32>
    %58 = vector.broadcast %57 : vector<8x1xf32> to vector<8x8xf32>
    %59 = arith.cmpf ogt, %58, %44 : vector<8x8xf32>
    %60 = vector.broadcast %57 : vector<8x1xf32> to vector<8x8xf32>
    %61 = arith.cmpf oeq, %60, %44 : vector<8x8xf32>
    %c1_i32 = arith.constant 1 : i32
    %62 = vector.broadcast %c1_i32 : i32 to vector<8x8xi32>
    %63 = arith.cmpi sgt, %25, %62 : vector<8x8xi32>
    %64 = arith.andi %61, %63 : vector<8x8xi1>
    %65 = arith.ori %59, %64 : vector<8x8xi1>
    %66 = arith.extui %65 : vector<8x8xi1> to vector<8x8xi32>
    %67 = arith.addi %56, %66 : vector<8x8xi32>
    %68 = vector.extract_strided_slice %44 {offsets = [0, 2], sizes = [8, 1], strides = [1, 1]} : vector<8x8xf32> to vector<8x1xf32>
    %69 = vector.broadcast %68 : vector<8x1xf32> to vector<8x8xf32>
    %70 = arith.cmpf ogt, %69, %44 : vector<8x8xf32>
    %71 = vector.broadcast %68 : vector<8x1xf32> to vector<8x8xf32>
    %72 = arith.cmpf oeq, %71, %44 : vector<8x8xf32>
    %c2_i32 = arith.constant 2 : i32
    %73 = vector.broadcast %c2_i32 : i32 to vector<8x8xi32>
    %74 = arith.cmpi sgt, %25, %73 : vector<8x8xi32>
    %75 = arith.andi %72, %74 : vector<8x8xi1>
    %76 = arith.ori %70, %75 : vector<8x8xi1>
    %77 = arith.extui %76 : vector<8x8xi1> to vector<8x8xi32>
    %78 = arith.addi %67, %77 : vector<8x8xi32>
    %79 = vector.extract_strided_slice %44 {offsets = [0, 3], sizes = [8, 1], strides = [1, 1]} : vector<8x8xf32> to vector<8x1xf32>
    %80 = vector.broadcast %79 : vector<8x1xf32> to vector<8x8xf32>
    %81 = arith.cmpf ogt, %80, %44 : vector<8x8xf32>
    %82 = vector.broadcast %79 : vector<8x1xf32> to vector<8x8xf32>
    %83 = arith.cmpf oeq, %82, %44 : vector<8x8xf32>
    %c3_i32 = arith.constant 3 : i32
    %84 = vector.broadcast %c3_i32 : i32 to vector<8x8xi32>
    %85 = arith.cmpi sgt, %25, %84 : vector<8x8xi32>
    %86 = arith.andi %83, %85 : vector<8x8xi1>
    %87 = arith.ori %81, %86 : vector<8x8xi1>
    %88 = arith.extui %87 : vector<8x8xi1> to vector<8x8xi32>
    %89 = arith.addi %78, %88 : vector<8x8xi32>
    %90 = vector.extract_strided_slice %44 {offsets = [0, 4], sizes = [8, 1], strides = [1, 1]} : vector<8x8xf32> to vector<8x1xf32>
    %91 = vector.broadcast %90 : vector<8x1xf32> to vector<8x8xf32>
    %92 = arith.cmpf ogt, %91, %44 : vector<8x8xf32>
    %93 = vector.broadcast %90 : vector<8x1xf32> to vector<8x8xf32>
    %94 = arith.cmpf oeq, %93, %44 : vector<8x8xf32>
    %c4_i32 = arith.constant 4 : i32
    %95 = vector.broadcast %c4_i32 : i32 to vector<8x8xi32>
    %96 = arith.cmpi sgt, %25, %95 : vector<8x8xi32>
    %97 = arith.andi %94, %96 : vector<8x8xi1>
    %98 = arith.ori %92, %97 : vector<8x8xi1>
    %99 = arith.extui %98 : vector<8x8xi1> to vector<8x8xi32>
    %100 = arith.addi %89, %99 : vector<8x8xi32>
    %101 = vector.extract_strided_slice %44 {offsets = [0, 5], sizes = [8, 1], strides = [1, 1]} : vector<8x8xf32> to vector<8x1xf32>
    %102 = vector.broadcast %101 : vector<8x1xf32> to vector<8x8xf32>
    %103 = arith.cmpf ogt, %102, %44 : vector<8x8xf32>
    %104 = vector.broadcast %101 : vector<8x1xf32> to vector<8x8xf32>
    %105 = arith.cmpf oeq, %104, %44 : vector<8x8xf32>
    %c5_i32 = arith.constant 5 : i32
    %106 = vector.broadcast %c5_i32 : i32 to vector<8x8xi32>
    %107 = arith.cmpi sgt, %25, %106 : vector<8x8xi32>
    %108 = arith.andi %105, %107 : vector<8x8xi1>
    %109 = arith.ori %103, %108 : vector<8x8xi1>
    %110 = arith.extui %109 : vector<8x8xi1> to vector<8x8xi32>
    %111 = arith.addi %100, %110 : vector<8x8xi32>
    %112 = vector.extract_strided_slice %44 {offsets = [0, 6], sizes = [8, 1], strides = [1, 1]} : vector<8x8xf32> to vector<8x1xf32>
    %113 = vector.broadcast %112 : vector<8x1xf32> to vector<8x8xf32>
    %114 = arith.cmpf ogt, %113, %44 : vector<8x8xf32>
    %115 = vector.broadcast %112 : vector<8x1xf32> to vector<8x8xf32>
    %116 = arith.cmpf oeq, %115, %44 : vector<8x8xf32>
    %c6_i32 = arith.constant 6 : i32
    %117 = vector.broadcast %c6_i32 : i32 to vector<8x8xi32>
    %118 = arith.cmpi sgt, %25, %117 : vector<8x8xi32>
    %119 = arith.andi %116, %118 : vector<8x8xi1>
    %120 = arith.ori %114, %119 : vector<8x8xi1>
    %121 = arith.extui %120 : vector<8x8xi1> to vector<8x8xi32>
    %122 = arith.addi %111, %121 : vector<8x8xi32>
    %123 = vector.extract_strided_slice %44 {offsets = [0, 7], sizes = [8, 1], strides = [1, 1]} : vector<8x8xf32> to vector<8x1xf32>
    %124 = vector.broadcast %123 : vector<8x1xf32> to vector<8x8xf32>
    %125 = arith.cmpf ogt, %124, %44 : vector<8x8xf32>
    %126 = vector.broadcast %123 : vector<8x1xf32> to vector<8x8xf32>
    %127 = arith.cmpf oeq, %126, %44 : vector<8x8xf32>
    %c7_i32 = arith.constant 7 : i32
    %128 = vector.broadcast %c7_i32 : i32 to vector<8x8xi32>
    %129 = arith.cmpi sgt, %25, %128 : vector<8x8xi32>
    %130 = arith.andi %127, %129 : vector<8x8xi1>
    %131 = arith.ori %125, %130 : vector<8x8xi1>
    %132 = arith.extui %131 : vector<8x8xi1> to vector<8x8xi32>
    %133 = arith.addi %122, %132 : vector<8x8xi32>
    %c3_i32_16 = arith.constant 3 : i32
    %134 = vector.broadcast %c3_i32_16 : i32 to vector<8x8xi32>
    %135 = arith.cmpi eq, %133, %134 : vector<8x8xi32>
    %c8_i32_17 = arith.constant 8 : i32
    %136 = vector.broadcast %c8_i32_17 : i32 to vector<8x8xi32>
    %137 = arith.select %135, %25, %136 : vector<8x8xi1>, vector<8x8xi32>
    %cst_18 = arith.constant dense<2147483647> : vector<8xi32>
    %138 = vector.multi_reduction <minsi>, %137, %cst_18 [1] : vector<8x8xi32> to vector<8xi32>
    %139 = vector.shape_cast %138 : vector<8xi32> to vector<8x1xi32>
    %140 = arith.minsi %42, %139 : vector<8x1xi32>
    %141 = vector.broadcast %140 : vector<8x1xi32> to vector<8x8xi32>
    %142 = arith.cmpi eq, %25, %141 : vector<8x8xi32>
    %143 = arith.extui %142 : vector<8x8xi1> to vector<8x8xi32>
    %144 = arith.sitofp %143 : vector<8x8xi32> to vector<8x8xf32>
    %cst_19 = arith.constant dense<0.000000e+00> : vector<8x32xf32>
    %145 = tpu.matmul %144, %3, %cst_19 {dimension_numbers = #tpu.dot_dimension_numbers<[1], [0], [0], [1], [0, 0, 1, 1], [], []>} : vector<8x8xf32>, vector<8x32xf32>, vector<8x32xf32> -> vector<8x32xf32>
    %c0_20 = arith.constant 0 : index
    %c0_21 = arith.constant 0 : index
    %146 = vector.load %arg4[%c0_20, %c0_21] : memref<8x32xf32, #tpu.memory_space<vmem>>, vector<8x32xf32>
    tpu.vector_store %arg4[%c0_20, %c0_21], %145 {strides = array<i32>} : memref<8x32xf32, #tpu.memory_space<vmem>>, vector<8x32xf32>,
    return
  }
  func.func @transform_0(%arg0: i32) -> (i32, i32) {
    %c0_i32 = arith.constant 0 : i32
    %c0_i32_0 = arith.constant 0 : i32
    return %arg0, %c0_i32 : i32, i32
  }
  func.func @transform_1(%arg0: i32) -> (i32, i32) {
    %c0_i32 = arith.constant 0 : i32
    %c0_i32_0 = arith.constant 0 : i32
    %c0_i32_1 = arith.constant 0 : i32
    return %c0_i32, %c0_i32_0 : i32, i32
  }
  func.func @transform_2(%arg0: i32) -> (i32, i32) {
    %c0_i32 = arith.constant 0 : i32
    %c0_i32_0 = arith.constant 0 : i32
    %c0_i32_1 = arith.constant 0 : i32
    return %c0_i32, %c0_i32_0 : i32, i32
  }
  func.func @transform_3(%arg0: i32) -> (i32, i32) {
    %c0_i32 = arith.constant 0 : i32
    %c0_i32_0 = arith.constant 0 : i32
    return %arg0, %c0_i32 : i32, i32
  }
}

module attributes {stable_mosaic.version = 11 : i64} {
  func.func @_curriculum_kernel(%arg0: i32, %arg1: memref<8x32xf32, #tpu.memory_space<vmem>>, %arg2: memref<8x32xf32, #tpu.memory_space<vmem>>, %arg3: memref<1x8xf32, #tpu.memory_space<vmem>>, %arg4: memref<8x32xf32, #tpu.memory_space<vmem>>) attributes {dimension_semantics = [#tpu.dimension_semantics<parallel>], iteration_bounds = array<i64: 1>, scalar_prefetch = 0 : i64, scratch_operands = 0 : i64, tpu.core_type = #tpu.core_type<tc>, window_params = [{transform_indices = @transform_0, window_bounds = array<i64: 8, 32>}, {pipeline_mode = #tpu.pipeline_mode<synchronous>, transform_indices = @transform_1, window_bounds = array<i64: 8, 32>}, {pipeline_mode = #tpu.pipeline_mode<synchronous>, transform_indices = @transform_2, window_bounds = array<i64: 1, 8>}, {transform_indices = @transform_3, window_bounds = array<i64: 8, 32>}]} {
    %c8_i32 = arith.constant 8 : i32
    %0 = arith.muli %arg0, %c8_i32 : i32
    %1 = tpu.assume_multiple %0, 8 : i32
    %c0 = arith.constant 0 : index
    %c0_0 = arith.constant 0 : index
    %2 = vector.load %arg1[%c0, %c0_0] : memref<8x32xf32, #tpu.memory_space<vmem>>, vector<8x32xf32>
    %c0_1 = arith.constant 0 : index
    %c0_2 = arith.constant 0 : index
    %3 = vector.load %arg2[%c0_1, %c0_2] : memref<8x32xf32, #tpu.memory_space<vmem>>, vector<8x32xf32>
    %4 = arith.index_cast %1 : i32 to index
    %c0_3 = arith.constant 0 : index
    %5 = vector.load %arg2[%4, %c0_3] : memref<8x32xf32, #tpu.memory_space<vmem>>, vector<8x32xf32>
    %cst = arith.constant dense<0.000000e+00> : vector<8x8xf32>
    %6 = tpu.matmul %2, %3, %cst {dimension_numbers = #tpu.dot_dimension_numbers<[1], [1], [0], [0], [0, 0, 1, 0], [], []>} : vector<8x32xf32>, vector<8x32xf32>, vector<8x8xf32> -> vector<8x8xf32>
    %7 = arith.mulf %2, %2 : vector<8x32xf32>
    %cst_4 = arith.constant dense<0.000000e+00> : vector<8xf32>
    %8 = vector.multi_reduction <add>, %7, %cst_4 [1] : vector<8x32xf32> to vector<8xf32>
    %9 = vector.shape_cast %8 : vector<8xf32> to vector<8x1xf32>
    %c0_5 = arith.constant 0 : index
    %c0_6 = arith.constant 0 : index
    %10 = vector.load %arg3[%c0_5, %c0_6] : memref<1x8xf32, #tpu.memory_space<vmem>>, vector<1x8xf32>
    %11 = vector.broadcast %9 : vector<8x1xf32> to vector<8x8xf32>
    %12 = vector.broadcast %10 : vector<1x8xf32> to vector<8x8xf32>
    %13 = arith.addf %11, %12 : vector<8x8xf32>
    %cst_7 = arith.constant 2.000000e+00 : f32
    %14 = vector.broadcast %cst_7 : f32 to vector<8x8xf32>
    %15 = arith.mulf %14, %6 : vector<8x8xf32>
    %16 = arith.subf %13, %15 : vector<8x8xf32>
    %cst_8 = arith.constant 0.000000e+00 : f32
    %17 = vector.broadcast %cst_8 : f32 to vector<8x8xf32>
    %18 = arith.maximumf %16, %17 : vector<8x8xf32>
    %19 = math.sqrt %18 : vector<8x8xf32>
    %20 = arith.subf %2, %5 : vector<8x32xf32>
    %21 = arith.mulf %20, %20 : vector<8x32xf32>
    %cst_9 = arith.constant dense<0.000000e+00> : vector<8xf32>
    %22 = vector.multi_reduction <add>, %21, %cst_9 [1] : vector<8x32xf32> to vector<8xf32>
    %23 = vector.shape_cast %22 : vector<8xf32> to vector<8x1xf32>
    %24 = math.sqrt %23 : vector<8x1xf32>
    %25 = tpu.iota {dimensions = array<i32: 1>} : vector<8x8xi32>
    %26 = tpu.iota {dimensions = array<i32: 0>} : vector<8x8xi32>
    %27 = vector.broadcast %1 : i32 to vector<8x8xi32>
    %28 = arith.addi %26, %27 : vector<8x8xi32>
    %29 = arith.cmpi eq, %25, %28 : vector<8x8xi32>
    %cst_10 = arith.constant 0x7F800000 : f32
    %30 = vector.broadcast %cst_10 : f32 to vector<8x8xf32>
    %31 = arith.select %29, %30, %19 : vector<8x8xi1>, vector<8x8xf32>
    %32 = vector.broadcast %24 : vector<8x1xf32> to vector<8x8xf32>
    %33 = arith.subf %31, %32 : vector<8x8xf32>
    %34 = math.absf %33 : vector<8x8xf32>
    %cst_11 = arith.constant dense<0x7F800000> : vector<8xf32>
    %35 = vector.multi_reduction <minimumf>, %34, %cst_11 [1] : vector<8x8xf32> to vector<8xf32>
    %36 = vector.shape_cast %35 : vector<8xf32> to vector<8x1xf32>
    %37 = vector.broadcast %36 : vector<8x1xf32> to vector<8x8xf32>
    %38 = arith.cmpf oeq, %34, %37 : vector<8x8xf32>
    %c8_i32_12 = arith.constant 8 : i32
    %39 = vector.broadcast %c8_i32_12 : i32 to vector<8x8xi32>
    %40 = arith.select %38, %25, %39 : vector<8x8xi1>, vector<8x8xi32>
    %cst_13 = arith.constant dense<2147483647> : vector<8xi32>
    %41 = vector.multi_reduction <minsi>, %40, %cst_13 [1] : vector<8x8xi32> to vector<8xi32>
    %42 = vector.shape_cast %41 : vector<8xi32> to vector<8x1xi32>
    %cst_14 = arith.constant -1.000000e+00 : f32
    %43 = vector.broadcast %cst_14 : f32 to vector<8x8xf32>
    %44 = arith.select %29, %43, %19 : vector<8x8xi1>, vector<8x8xf32>
    %c0_i32 = arith.constant 0 : i32
    %45 = vector.broadcast %c0_i32 : i32 to vector<8x8xi32>
    %46 = vector.extract_strided_slice %44 {offsets = [0, 0], sizes = [8, 1], strides = [1, 1]} : vector<8x8xf32> to vector<8x1xf32>
    %47 = vector.broadcast %46 : vector<8x1xf32> to vector<8x8xf32>
    %48 = arith.cmpf ogt, %47, %44 : vector<8x8xf32>
    %49 = vector.broadcast %46 : vector<8x1xf32> to vector<8x8xf32>
    %50 = arith.cmpf oeq, %49, %44 : vector<8x8xf32>
    %c0_i32_15 = arith.constant 0 : i32
    %51 = vector.broadcast %c0_i32_15 : i32 to vector<8x8xi32>
    %52 = arith.cmpi sgt, %25, %51 : vector<8x8xi32>
    %53 = arith.andi %50, %52 : vector<8x8xi1>
    %54 = arith.ori %48, %53 : vector<8x8xi1>
    %55 = arith.extui %54 : vector<8x8xi1> to vector<8x8xi32>
    %56 = arith.addi %45, %55 : vector<8x8xi32>
    %57 = vector.extract_strided_slice %44 {offsets = [0, 1], sizes = [8, 1], strides = [1, 1]} : vector<8x8xf32> to vector<8x1xf32>
    %58 = vector.broadcast %57 : vector<8x1xf32> to vector<8x8xf32>
    %59 = arith.cmpf ogt, %58, %44 : vector<8x8xf32>
    %60 = vector.broadcast %57 : vector<8x1xf32> to vector<8x8xf32>
    %61 = arith.cmpf oeq, %60, %44 : vector<8x8xf32>
    %c1_i32 = arith.constant 1 : i32
    %62 = vector.broadcast %c1_i32 : i32 to vector<8x8xi32>
    %63 = arith.cmpi sgt, %25, %62 : vector<8x8xi32>
    %64 = arith.andi %61, %63 : vector<8x8xi1>
    %65 = arith.ori %59, %64 : vector<8x8xi1>
    %66 = arith.extui %65 : vector<8x8xi1> to vector<8x8xi32>
    %67 = arith.addi %56, %66 : vector<8x8xi32>
    %68 = vector.extract_strided_slice %44 {offsets = [0, 2], sizes = [8, 1], strides = [1, 1]} : vector<8x8xf32> to vector<8x1xf32>
    %69 = vector.broadcast %68 : vector<8x1xf32> to vector<8x8xf32>
    %70 = arith.cmpf ogt, %69, %44 : vector<8x8xf32>
    %71 = vector.broadcast %68 : vector<8x1xf32> to vector<8x8xf32>
    %72 = arith.cmpf oeq, %71, %44 : vector<8x8xf32>
    %c2_i32 = arith.constant 2 : i32
    %73 = vector.broadcast %c2_i32 : i32 to vector<8x8xi32>
    %74 = arith.cmpi sgt, %25, %73 : vector<8x8xi32>
    %75 = arith.andi %72, %74 : vector<8x8xi1>
    %76 = arith.ori %70, %75 : vector<8x8xi1>
    %77 = arith.extui %76 : vector<8x8xi1> to vector<8x8xi32>
    %78 = arith.addi %67, %77 : vector<8x8xi32>
    %79 = vector.extract_strided_slice %44 {offsets = [0, 3], sizes = [8, 1], strides = [1, 1]} : vector<8x8xf32> to vector<8x1xf32>
    %80 = vector.broadcast %79 : vector<8x1xf32> to vector<8x8xf32>
    %81 = arith.cmpf ogt, %80, %44 : vector<8x8xf32>
    %82 = vector.broadcast %79 : vector<8x1xf32> to vector<8x8xf32>
    %83 = arith.cmpf oeq, %82, %44 : vector<8x8xf32>
    %c3_i32 = arith.constant 3 : i32
    %84 = vector.broadcast %c3_i32 : i32 to vector<8x8xi32>
    %85 = arith.cmpi sgt, %25, %84 : vector<8x8xi32>
    %86 = arith.andi %83, %85 : vector<8x8xi1>
    %87 = arith.ori %81, %86 : vector<8x8xi1>
    %88 = arith.extui %87 : vector<8x8xi1> to vector<8x8xi32>
    %89 = arith.addi %78, %88 : vector<8x8xi32>
    %90 = vector.extract_strided_slice %44 {offsets = [0, 4], sizes = [8, 1], strides = [1, 1]} : vector<8x8xf32> to vector<8x1xf32>
    %91 = vector.broadcast %90 : vector<8x1xf32> to vector<8x8xf32>
    %92 = arith.cmpf ogt, %91, %44 : vector<8x8xf32>
    %93 = vector.broadcast %90 : vector<8x1xf32> to vector<8x8xf32>
    %94 = arith.cmpf oeq, %93, %44 : vector<8x8xf32>
    %c4_i32 = arith.constant 4 : i32
    %95 = vector.broadcast %c4_i32 : i32 to vector<8x8xi32>
    %96 = arith.cmpi sgt, %25, %95 : vector<8x8xi32>
    %97 = arith.andi %94, %96 : vector<8x8xi1>
    %98 = arith.ori %92, %97 : vector<8x8xi1>
    %99 = arith.extui %98 : vector<8x8xi1> to vector<8x8xi32>
    %100 = arith.addi %89, %99 : vector<8x8xi32>
    %101 = vector.extract_strided_slice %44 {offsets = [0, 5], sizes = [8, 1], strides = [1, 1]} : vector<8x8xf32> to vector<8x1xf32>
    %102 = vector.broadcast %101 : vector<8x1xf32> to vector<8x8xf32>
    %103 = arith.cmpf ogt, %102, %44 : vector<8x8xf32>
    %104 = vector.broadcast %101 : vector<8x1xf32> to vector<8x8xf32>
    %105 = arith.cmpf oeq, %104, %44 : vector<8x8xf32>
    %c5_i32 = arith.constant 5 : i32
    %106 = vector.broadcast %c5_i32 : i32 to vector<8x8xi32>
    %107 = arith.cmpi sgt, %25, %106 : vector<8x8xi32>
    %108 = arith.andi %105, %107 : vector<8x8xi1>
    %109 = arith.ori %103, %108 : vector<8x8xi1>
    %110 = arith.extui %109 : vector<8x8xi1> to vector<8x8xi32>
    %111 = arith.addi %100, %110 : vector<8x8xi32>
    %112 = vector.extract_strided_slice %44 {offsets = [0, 6], sizes = [8, 1], strides = [1, 1]} : vector<8x8xf32> to vector<8x1xf32>
    %113 = vector.broadcast %112 : vector<8x1xf32> to vector<8x8xf32>
    %114 = arith.cmpf ogt, %113, %44 : vector<8x8xf32>
    %115 = vector.broadcast %112 : vector<8x1xf32> to vector<8x8xf32>
    %116 = arith.cmpf oeq, %115, %44 : vector<8x8xf32>
    %c6_i32 = arith.constant 6 : i32
    %117 = vector.broadcast %c6_i32 : i32 to vector<8x8xi32>
    %118 = arith.cmpi sgt, %25, %117 : vector<8x8xi32>
    %119 = arith.andi %116, %118 : vector<8x8xi1>
    %120 = arith.ori %114, %119 : vector<8x8xi1>
    %121 = arith.extui %120 : vector<8x8xi1> to vector<8x8xi32>
    %122 = arith.addi %111, %121 : vector<8x8xi32>
    %123 = vector.extract_strided_slice %44 {offsets = [0, 7], sizes = [8, 1], strides = [1, 1]} : vector<8x8xf32> to vector<8x1xf32>
    %124 = vector.broadcast %123 : vector<8x1xf32> to vector<8x8xf32>
    %125 = arith.cmpf ogt, %124, %44 : vector<8x8xf32>
    %126 = vector.broadcast %123 : vector<8x1xf32> to vector<8x8xf32>
    %127 = arith.cmpf oeq, %126, %44 : vector<8x8xf32>
    %c7_i32 = arith.constant 7 : i32
    %128 = vector.broadcast %c7_i32 : i32 to vector<8x8xi32>
    %129 = arith.cmpi sgt, %25, %128 : vector<8x8xi32>
    %130 = arith.andi %127, %129 : vector<8x8xi1>
    %131 = arith.ori %125, %130 : vector<8x8xi1>
    %132 = arith.extui %131 : vector<8x8xi1> to vector<8x8xi32>
    %133 = arith.addi %122, %132 : vector<8x8xi32>
    %c3_i32_16 = arith.constant 3 : i32
    %134 = vector.broadcast %c3_i32_16 : i32 to vector<8x8xi32>
    %135 = arith.cmpi eq, %133, %134 : vector<8x8xi32>
    %c8_i32_17 = arith.constant 8 : i32
    %136 = vector.broadcast %c8_i32_17 : i32 to vector<8x8xi32>
    %137 = arith.select %135, %25, %136 : vector<8x8xi1>, vector<8x8xi32>
    %cst_18 = arith.constant dense<2147483647> : vector<8xi32>
    %138 = vector.multi_reduction <minsi>, %137, %cst_18 [1] : vector<8x8xi32> to vector<8xi32>
    %139 = vector.shape_cast %138 : vector<8xi32> to vector<8x1xi32>
    %140 = arith.minsi %42, %139 : vector<8x1xi32>
    %141 = vector.broadcast %140 : vector<8x1xi32> to vector<8x8xi32>
    %142 = arith.cmpi eq, %25, %141 : vector<8x8xi32>
    %143 = arith.extui %142 : vector<8x8xi1> to vector<8x8xi32>
    %144 = arith.sitofp %143 : vector<8x8xi32> to vector<8x8xf32>
    %cst_19 = arith.constant dense<0.000000e+00> : vector<8x32xf32>
    %145 = tpu.matmul %144, %3, %cst_19 {dimension_numbers = #tpu.dot_dimension_numbers<[1], [0], [0], [1], [0, 0, 1, 1], [], []>} : vector<8x8xf32>, vector<8x32xf32>, vector<8x32xf32> -> vector<8x32xf32>
    %c0_20 = arith.constant 0 : index
    %c0_21 = arith.constant 0 : index
    %146 = vector.load %arg4[%c0_20, %c0_21] : memref<8x32xf32, #tpu.memory_space<vmem>>, vector<8x32xf32>
    tpu.vector_store %arg4[%c0_20, %c0_21], %145 {strides = array<i32>} : memref<8x32xf32, #tpu.memory_space<vmem>>, vector<8x32xf32>,
    return
  }
  func.func @transform_0(%arg0: i32) -> (i32, i32) {
    %c0_i32 = arith.constant 0 : i32
    %c0_i32_0 = arith.constant 0 : i32
    return %arg0, %c0_i32 : i32, i32
  }
  func.func @transform_1(%arg0: i32) -> (i32, i32) {
    %c0_i32 = arith.constant 0 : i32
    %c0_i32_0 = arith.constant 0 : i32
    %c0_i32_1 = arith.constant 0 : i32
    return %c0_i32, %c0_i32_0 : i32, i32
  }
  func.func @transform_2(%arg0: i32) -> (i32, i32) {
    %c0_i32 = arith.constant 0 : i32
    %c0_i32_0 = arith.constant 0 : i32
    %c0_i32_1 = arith.constant 0 : i32
    return %c0_i32, %c0_i32_0 : i32, i32
  }
  func.func @transform_3(%arg0: i32) -> (i32, i32) {
    %c0_i32 = arith.constant 0 : i32
    %c0_i32_0 = arith.constant 0 : i32
    return %arg0, %c0_i32 : i32, i32
  }
}

</mosaic_0001>

<llo_original>
// kernel: tpu_custom_call.1
$region0: #{tpu_custom_call.1}
  #allocation0 [shape = 'u32[]', space=smem, size = 0x4, offset = 0x4, fixed_abs, tag = 'smem constant byte address 0x4 - core index']
  #allocation1 [shape = 'u32[144,128]{1,0:T(1,128)}', space=vmem, size = 0x12000, scoped, tag = 'internal scratch']
  %s0 = inlined_call_operand.hbm [shape: f32[8,32], index: 0, kind: input, shape index: {}]
  %s1 = inlined_call_operand.hbm [shape: f32[8,32], index: 1, kind: input, shape index: {}]
  %s2 = inlined_call_operand.vmem [shape: f32[1,8], index: 2, kind: input, shape index: {}]
  %s3 = inlined_call_operand.hbm [shape: f32[8,32], index: 3, kind: output, shape index: {}]
  %s4 = sld [smem:[#allocation0]]
  $region30: #{tpu_custom_call.1} parent=0
    _
  %s6 = ssub.s32 1, %s4
  %s7 = scalar_select 0, %s6, %s4
  $region1: #{tpu_custom_call.1} parent=0
    #allocation2 [shape = 'u8[4096]{0}', space=vmem, size = 0x1000, scoped, tag = 'input window, operand 0, single buffered']
    #allocation3 [shape = 's32[1]{0}', space=sflag, size = 0x4, scoped, tag = 'scoped memory for tpu_custom_call.1']
    #allocation4 [shape = 's32[1]{0}', space=sflag, size = 0x4, scoped, tag = 'scoped memory for tpu_custom_call.1']
    #allocation5 [shape = 'u8[4096]{0}', space=vmem, size = 0x1000, scoped, tag = 'input window, operand 1, single buffered']
    #allocation6 [shape = 's32[1]{0}', space=sflag, size = 0x4, scoped, tag = 'scoped memory for tpu_custom_call.1']
    #allocation7 [shape = 'u8[4096]{0}', space=vmem, size = 0x1000, scoped, tag = 'output window, operand 0, single buffered']
    %8 = vsyncpa [#allocation3], 0
    %9 = vsyncpa [#allocation6], 0
    %10 = vsyncpa [#allocation4], 0
    // Predicated region
    $region2: #{tpu_custom_call.1} parent=1 // pred_check
      _
    $region3: #{tpu_custom_call.1} parent=1 // pred_check_branch
      %12 = sbr.rel (0) target = $region5
    $region4: #{tpu_custom_call.1} parent=1 // pred_region
      %s14 = ssub.s32 128, 128
      %15 = vsyncadd [#allocation3], %s14
      %s17 = sshll.u32 [#allocation2], 4
      %s18 = int_to_ptr.vmem [resolvable:$true] %s17
      %20 = dma.hbm_to_vmem [thread:$0]  %s0, 128, %s18, [#allocation3]
    $region5: #{tpu_custom_call.1} parent=1 // pred_fallthru
      _
    // Predicated region
    $region6: #{tpu_custom_call.1} parent=1 // pred_check
      _
    $region7: #{tpu_custom_call.1} parent=1 // pred_check_branch
      %22 = sbr.rel (0) target = $region9
    $region8: #{tpu_custom_call.1} parent=1 // pred_region
      %s24 = ssub.s32 128, 128
      %25 = vsyncadd [#allocation6], %s24
      %s27 = sshll.u32 [#allocation5], 4
      %s28 = int_to_ptr.vmem [resolvable:$true] %s27
      %30 = dma.hbm_to_vmem [thread:$0]  %s1, 128, %s28, [#allocation6]
    $region9: #{tpu_custom_call.1} parent=1 // pred_fallthru
      _
    // Predicated region
    $region10: #{tpu_custom_call.1} parent=1 // pred_check
      _
    $region11: #{tpu_custom_call.1} parent=1 // pred_check_branch
      %32 = sbr.rel (0) target = $region13
    $region12: #{tpu_custom_call.1} parent=1 // pred_region
      _
    $region13: #{tpu_custom_call.1} parent=1 // pred_fallthru
      _
    // Predicated region
    $region14: #{tpu_custom_call.1} parent=1 // pred_check
      _
    $region15: #{tpu_custom_call.1} parent=1 // pred_check_branch
      %34 = sbr.rel (0) target = $region17
    $region16: #{tpu_custom_call.1} parent=1 // pred_region
      %35 = dma.done [#allocation3], 128
    $region17: #{tpu_custom_call.1} parent=1 // pred_fallthru
      _
    // Predicated region
    $region18: #{tpu_custom_call.1} parent=1 // pred_check
      _
    $region19: #{tpu_custom_call.1} parent=1 // pred_check_branch
      %37 = sbr.rel (0) target = $region21
    $region20: #{tpu_custom_call.1} parent=1 // pred_region
      %38 = dma.done [#allocation6], 128
    $region21: #{tpu_custom_call.1} parent=1 // pred_fallthru
      _
    %s39 = smul.u32 0, 8
    %v40 = vld [vmem:[#allocation2] sm:$0xff]
    %v41 = vld [vmem:[#allocation5] sm:$0xff]
    %s42 = scalar_lea.vmem [#allocation5], %s39
    %v43 = vld [vmem:[%s42] sm:$0xff]
    %vm44 = vcmask 261120
    %v46 = vsel %vm44, %v40, 0
    %v49 = vsel %vm44, %v41, 0
    %51 = vmatprep.subr.mxu0 0.0
    %52 = vmatpush1.xpose.msra.mxu0 0.0
    %53 = vmatprep.subr.mxu0 0.0
    %54 = vmatpush1.xpose.msra.mxu0 0.0
    %55 = vmatprep.subr.mxu0 0.0
    %56 = vmatpush1.xpose.msra.mxu0 0.0
    %57 = vmatprep.subr.mxu0 0.0
    %58 = vmatpush1.xpose.msra.mxu0 0.0
    %59 = vmatprep.subr.mxu0 0.0
    %60 = vmatpush1.xpose.msra.mxu0 0.0
    %61 = vmatprep.subr.mxu0 0.0
    %62 = vmatpush1.xpose.msra.mxu0 0.0
    %63 = vmatprep.subr.mxu0 0.0
    %64 = vmatpush1.xpose.msra.mxu0 0.0
    %65 = vmatprep.subr.mxu0 0.0
    %66 = vmatpush1.xpose.msra.mxu0 0.0
    %67 = vmatprep.subr.mxu0 0.0
    %68 = vmatpush1.xpose.msra.mxu0 0.0
    %69 = vmatprep.subr.mxu0 0.0
    %70 = vmatpush1.xpose.msra.mxu0 0.0
    %71 = vmatprep.subr.mxu0 0.0
    %72 = vmatpush1.xpose.msra.mxu0 0.0
    %73 = vmatprep.subr.mxu0 0.0
    %74 = vmatpush1.xpose.msra.mxu0 0.0
    %75 = vmatprep.subr.mxu0 0.0
    %76 = vmatpush1.xpose.msra.mxu0 0.0
    %77 = vmatprep.subr.mxu0 0.0
    %78 = vmatpush1.xpose.msra.mxu0 0.0
    %79 = vmatprep.subr.mxu0 0.0
    %80 = vmatpush1.xpose.msra.mxu0 0.0
    %81 = vmatprep.subr.mxu0 0.0
    %82 = vmatpush1.xpose.msra.mxu0 %v49
    %83 = vmatprep.subr.mxu0 0.0
    %84 = vmatpush2.xpose.msra.mxu0 0.0
    %85 = vmatprep.subr.mxu0 0.0
    %86 = vmatpush2.xpose.msra.mxu0 0.0
    %87 = vmatprep.subr.mxu0 0.0
    %88 = vmatpush2.xpose.msra.mxu0 0.0
    %89 = vmatprep.subr.mxu0 0.0
    %90 = vmatpush2.xpose.msra.mxu0 0.0
    %91 = vmatprep.subr.mxu0 0.0
    %92 = vmatpush2.xpose.msra.mxu0 0.0
    %93 = vmatprep.subr.mxu0 0.0
    %94 = vmatpush2.xpose.msra.mxu0 0.0
    %95 = vmatprep.subr.mxu0 0.0
    %96 = vmatpush2.xpose.msra.mxu0 0.0
    %97 = vmatprep.subr.mxu0 0.0
    %98 = vmatpush2.xpose.msra.mxu0 0.0
    %99 = vmatprep.subr.mxu0 0.0
    %100 = vmatpush2.xpose.msra.mxu0 0.0
    %101 = vmatprep.subr.mxu0 0.0
    %102 = vmatpush2.xpose.msra.mxu0 0.0
    %103 = vmatprep.subr.mxu0 0.0
    %104 = vmatpush2.xpose.msra.mxu0 0.0
    %105 = vmatprep.subr.mxu0 0.0
    %106 = vmatpush2.xpose.msra.mxu0 0.0
    %107 = vmatprep.subr.mxu0 0.0
    %108 = vmatpush2.xpose.msra.mxu0 0.0
    %109 = vmatprep.subr.mxu0 0.0
    %110 = vmatpush2.xpose.msra.mxu0 0.0
    %111 = vmatprep.subr.mxu0 0.0
    %112 = vmatpush2.xpose.msra.mxu0 0.0
    %113 = vmatprep.subr.mxu0 0.0
    %114 = vmatpush2.xpose.msra.mxu0 0.0
    %115 = vmatprep.mubr.f32.mxu0 0.0
    %116 = vmatmul.mubr.f32.gmra.mxu0 %v46
    %v117 = vpop.f32.mrf.mxu0
    %v118 = vadd.f32 0.0, %v117
    %v119 = vpop.f32.mrf.mxu0
    %120 = vdwg.mxu0
    %v121 = vmul.f32 %v40, %v40
    %v122 = vsel %vm44, %v121, 0.0
    %123 = vadd.xlane.f32.xlu0 %v122
    %v124 = vpop.xlane.xlu0 %123
    %v125 = vld [vmem:[%s2] sm:$0x1]
    %v127 = vlaneseq
    %v128 = vshrl.u32 %v127, 7
    %v129 = vsub.s32 0, %v128
    %v130 = vrot.slane %v125, %v129
    %v132 = vadd.f32 %v124, %v130
    %v133 = vmul.f32 %v118, 2.0
    %v134 = vsub.f32 %v132, %v133
    %v135 = vmax.f32 %v134, 0.0
    %v136 = vrsqrt.pop %v135
    %v137 = vmul.f32 %v135, %v136
    %vm138 = vcmp.eq.f32.partialorder %v135, inf
    %v139 = vsel %vm138, %v135, %v137
    %vm140 = vcmp.eq.f32.partialorder %v135, 0.0
    %v141 = vand.u32 %v135, 2147483648
    %v142 = vsel %vm140, %v141, %v139
    %v143 = vsub.f32 %v40, %v43
    %v144 = vmul.f32 %v143, %v143
    %v145 = vsel %vm44, %v144, 0.0
    %146 = vadd.xlane.f32.xlu0 %v145
    %v147 = vpop.xlane.xlu0 %146
    %v148 = vrsqrt.pop %v147
    %v149 = vmul.f32 %v147, %v148
    %vm150 = vcmp.eq.f32.partialorder %v147, inf
    %v151 = vsel %vm150, %v147, %v149
    %vm152 = vcmp.eq.f32.partialorder %v147, 0.0
    %v153 = vand.u32 %v147, 2147483648
    %v154 = vsel %vm152, %v153, %v151
    %v155 = vlaneseq
    %v156 = vand.u32 %v155, 127
    %v157 = vlaneseq
    %v158 = vshrl.u32 %v157, 7
    %v159 = vstv %s39
    %v160 = vadd.s32 %v158, %v159
    %vm161 = vcmp.eq.s32.totalorder %v156, %v160
    %v162 = vsel %vm161, inf, %v142
    %v163 = vsub.f32 %v162, %v154
    %v164 = vand.u32 2147483647, %v163
    %vm165 = vcmask 64512
    %v166 = vsel %vm165, %v164, inf
    %167 = vmin.xlane.f32.xlu0 %v166
    %v168 = vpop.xlane.xlu0 %167
    %vm169 = vcmp.eq.f32.partialorder %v164, %v168
    %v170 = vsel %vm169, %v156, 8
    %v171 = vsel %vm165, %v170, 2147483647
    %v172 = vand.u32 %v171, 65535
    %v173 = vshra.s32 %v171, 16
    %v174 = vcvt.s32.f32 %v172
    %v175 = vcvt.s32.f32 %v173
    %176 = vmin.xlane.f32.xlu0 %v175
    %v177 = vpop.xlane.xlu0 %176
    %vm178 = vcmp.eq.f32.partialorder %v175, %v177
    %v179 = vsel %vm178, %v174, inf
    %180 = vmin.xlane.f32.xlu0 %v179
    %v181 = vpop.xlane.xlu0 %180
    %v182 = vcvt.f32.s32 %v181
    %v183 = vcvt.f32.s32 %v177
    %v184 = vshll.u32 %v183, 16
    %v185 = vadd.s32 %v184, %v182
    %v186 = vsel %vm161, -1.0, %v142
    %188 = vset.pattern.permute.xlu0 0
    %189 = vperm.xlu0 %188, %v186
    %v190 = vpop.permute.xlu0 %189
    %vm192 = vcmp.gt.f32.partialorder %v190, %v186
    %vm193 = vcmp.eq.f32.partialorder %v190, %v186
    %vm194 = vcmp.gt.s32.totalorder %v156, 0
    %vm195 = vmand %vm193, %vm194
    %vm196 = vmor %vm192, %vm195
    %v197 = vsel %vm196, 1, 0
    %198 = vset.pattern.permute.xlu0 1
    %199 = vperm.xlu0 %198, %v186
    %v200 = vpop.permute.xlu0 %199
    %vm202 = vcmp.gt.f32.partialorder %v200, %v186
    %vm203 = vcmp.eq.f32.partialorder %v200, %v186
    %vm204 = vcmp.gt.s32.totalorder %v156, 1
    %vm205 = vmand %vm203, %vm204
    %vm206 = vmor %vm202, %vm205
    %v207 = vsel %vm206, 1, 0
    %v208 = vadd.s32 %v197, %v207
    %209 = vset.pattern.permute.xlu0 2
    %210 = vperm.xlu0 %209, %v186
    %v211 = vpop.permute.xlu0 %210
    %vm213 = vcmp.gt.f32.partialorder %v211, %v186
    %vm214 = vcmp.eq.f32.partialorder %v211, %v186
    %vm215 = vcmp.gt.s32.totalorder %v156, 2
    %vm216 = vmand %vm214, %vm215
    %vm217 = vmor %vm213, %vm216
    %v218 = vsel %vm217, 1, 0
    %v219 = vadd.s32 %v208, %v218
    %220 = vset.pattern.permute.xlu0 3
    %221 = vperm.xlu0 %220, %v186
    %v222 = vpop.permute.xlu0 %221
    %vm224 = vcmp.gt.f32.partialorder %v222, %v186
    %vm225 = vcmp.eq.f32.partialorder %v222, %v186
    %vm226 = vcmp.gt.s32.totalorder %v156, 3
    %vm227 = vmand %vm225, %vm226
    %vm228 = vmor %vm224, %vm227
    %v229 = vsel %vm228, 1, 0
    %v230 = vadd.s32 %v219, %v229
    %231 = vset.pattern.permute.xlu0 4
    %232 = vperm.xlu0 %231, %v186
    %v233 = vpop.permute.xlu0 %232
    %vm235 = vcmp.gt.f32.partialorder %v233, %v186
    %vm236 = vcmp.eq.f32.partialorder %v233, %v186
    %vm237 = vcmp.gt.s32.totalorder %v156, 4
    %vm238 = vmand %vm236, %vm237
    %vm239 = vmor %vm235, %vm238
    %v240 = vsel %vm239, 1, 0
    %v241 = vadd.s32 %v230, %v240
    %242 = vset.pattern.permute.xlu0 5
    %243 = vperm.xlu0 %242, %v186
    %v244 = vpop.permute.xlu0 %243
    %vm246 = vcmp.gt.f32.partialorder %v244, %v186
    %vm247 = vcmp.eq.f32.partialorder %v244, %v186
    %vm248 = vcmp.gt.s32.totalorder %v156, 5
    %vm249 = vmand %vm247, %vm248
    %vm250 = vmor %vm246, %vm249
    %v251 = vsel %vm250, 1, 0
    %v252 = vadd.s32 %v241, %v251
    %253 = vset.pattern.permute.xlu0 6
    %254 = vperm.xlu0 %253, %v186
    %v255 = vpop.permute.xlu0 %254
    %vm257 = vcmp.gt.f32.partialorder %v255, %v186
    %vm258 = vcmp.eq.f32.partialorder %v255, %v186
    %vm259 = vcmp.gt.s32.totalorder %v156, 6
    %vm260 = vmand %vm258, %vm259
    %vm261 = vmor %vm257, %vm260
    %v262 = vsel %vm261, 1, 0
    %v263 = vadd.s32 %v252, %v262
    %264 = vset.pattern.permute.xlu0 7
    %265 = vperm.xlu0 %264, %v186
    %v266 = vpop.permute.xlu0 %265
    %vm268 = vcmp.gt.f32.partialorder %v266, %v186
    %vm269 = vcmp.eq.f32.partialorder %v266, %v186
    %vm270 = vcmp.gt.s32.totalorder %v156, 7
    %vm271 = vmand %vm269, %vm270
    %vm272 = vmor %vm268, %vm271
    %v273 = vsel %vm272, 1, 0
    %v274 = vadd.s32 %v263, %v273
    %vm275 = vcmp.eq.s32.totalorder %v274, 3
    %v276 = vsel %vm275, %v156, 8
    %v277 = vsel %vm165, %v276, 2147483647
    %v278 = vand.u32 %v277, 65535
    %v279 = vshra.s32 %v277, 16
    %v280 = vcvt.s32.f32 %v278
    %v281 = vcvt.s32.f32 %v279
    %282 = vmin.xlane.f32.xlu0 %v281
    %v283 = vpop.xlane.xlu0 %282
    %vm284 = vcmp.eq.f32.partialorder %v281, %v283
    %v285 = vsel %vm284, %v280, inf
    %286 = vmin.xlane.f32.xlu0 %v285
    %v287 = vpop.xlane.xlu0 %286
    %v288 = vcvt.f32.s32 %v287
    %v289 = vcvt.f32.s32 %v283
    %v290 = vshll.u32 %v289, 16
    %v291 = vadd.s32 %v290, %v288
    %vm292 = vcmp.lt.s32.totalorder %v185, %v291
    %v293 = vsel %vm292, %v185, %v291
    %vm294 = vcmp.eq.s32.totalorder %v156, %v293
    %v295 = vsel %vm294, 1, 0
    %v296 = vcvt.s32.f32 %v295
    %v298 = vsel %vm165, %v296, 0
    %300 = vmatprep.subr.mxu0 0.0
    %301 = vmatpush1.msra.mxu0 0.0
    %302 = vmatprep.subr.mxu0 0.0
    %303 = vmatpush1.msra.mxu0 0.0
    %304 = vmatprep.subr.mxu0 0.0
    %305 = vmatpush1.msra.mxu0 0.0
    %306 = vmatprep.subr.mxu0 0.0
    %307 = vmatpush1.msra.mxu0 0.0
    %308 = vmatprep.subr.mxu0 0.0
    %309 = vmatpush1.msra.mxu0 0.0
    %310 = vmatprep.subr.mxu0 0.0
    %311 = vmatpush1.msra.mxu0 0.0
    %312 = vmatprep.subr.mxu0 0.0
    %313 = vmatpush1.msra.mxu0 0.0
    %314 = vmatprep.subr.mxu0 0.0
    %315 = vmatpush1.msra.mxu0 0.0
    %316 = vmatprep.subr.mxu0 0.0
    %317 = vmatpush1.msra.mxu0 0.0
    %318 = vmatprep.subr.mxu0 0.0
    %319 = vmatpush1.msra.mxu0 0.0
    %320 = vmatprep.subr.mxu0 0.0
    %321 = vmatpush1.msra.mxu0 0.0
    %322 = vmatprep.subr.mxu0 0.0
    %323 = vmatpush1.msra.mxu0 0.0
    %324 = vmatprep.subr.mxu0 0.0
    %325 = vmatpush1.msra.mxu0 0.0
    %326 = vmatprep.subr.mxu0 0.0
    %327 = vmatpush1.msra.mxu0 0.0
    %328 = vmatprep.subr.mxu0 0.0
    %329 = vmatpush1.msra.mxu0 0.0
    %330 = vmatprep.subr.mxu0 0.0
    %331 = vmatpush1.msra.mxu0 %v41
    %332 = vmatprep.subr.mxu0 0.0
    %333 = vmatpush2.msra.mxu0 0.0
    %334 = vmatprep.subr.mxu0 0.0
    %335 = vmatpush2.msra.mxu0 0.0
    %336 = vmatprep.subr.mxu0 0.0
    %337 = vmatpush2.msra.mxu0 0.0
    %338 = vmatprep.subr.mxu0 0.0
    %339 = vmatpush2.msra.mxu0 0.0
    %340 = vmatprep.subr.mxu0 0.0
    %341 = vmatpush2.msra.mxu0 0.0
    %342 = vmatprep.subr.mxu0 0.0
    %343 = vmatpush2.msra.mxu0 0.0
    %344 = vmatprep.subr.mxu0 0.0
    %345 = vmatpush2.msra.mxu0 0.0
    %346 = vmatprep.subr.mxu0 0.0
    %347 = vmatpush2.msra.mxu0 0.0
    %348 = vmatprep.subr.mxu0 0.0
    %349 = vmatpush2.msra.mxu0 0.0
    %350 = vmatprep.subr.mxu0 0.0
    %351 = vmatpush2.msra.mxu0 0.0
    %352 = vmatprep.subr.mxu0 0.0
    %353 = vmatpush2.msra.mxu0 0.0
    %354 = vmatprep.subr.mxu0 0.0
    %355 = vmatpush2.msra.mxu0 0.0
    %356 = vmatprep.subr.mxu0 0.0
    %357 = vmatpush2.msra.mxu0 0.0
    %358 = vmatprep.subr.mxu0 0.0
    %359 = vmatpush2.msra.mxu0 0.0
    %360 = vmatprep.subr.mxu0 0.0
    %361 = vmatpush2.msra.mxu0 0.0
    %362 = vmatprep.subr.mxu0 0.0
    %363 = vmatpush2.msra.mxu0 0.0
    %364 = vmatprep.mubr.f32.mxu0 0.0
    %365 = vmatmul.mubr.f32.gmra.mxu0 %v298
    %v366 = vpop.f32.mrf.mxu0
    %v367 = vadd.f32 0.0, %v366
    %v368 = vpop.f32.mrf.mxu0
    %369 = vdwg.mxu0
    %370 = vst.msk [vmem:[#allocation7] sm:$0xff] %vm44, %v367
    // Predicated region
    $region22: #{tpu_custom_call.1} parent=1 // pred_check
      _
    $region23: #{tpu_custom_call.1} parent=1 // pred_check_branch
      %372 = sbr.rel (0) target = $region25
    $region24: #{tpu_custom_call.1} parent=1 // pred_region
      %s374 = ssub.s32 128, 128
      %375 = vsyncadd [#allocation4], %s374
      %s377 = sshll.u32 [#allocation7], 4
      %s378 = int_to_ptr.vmem [resolvable:$true] %s377
      %380 = dma.vmem_to_hbm [thread:$0]  %s378, 128, %s3, [#allocation4]
    $region25: #{tpu_custom_call.1} parent=1 // pred_fallthru
      _
    // Predicated region
    $region26: #{tpu_custom_call.1} parent=1 // pred_check
      _
    $region27: #{tpu_custom_call.1} parent=1 // pred_check_branch
      %382 = sbr.rel (0) target = $region29
    $region28: #{tpu_custom_call.1} parent=1 // pred_region
      %383 = dma.done [#allocation4], 128
    $region29: #{tpu_custom_call.1} parent=1 // pred_fallthru
      _
    %384 = vsyncpa [#allocation3], 1
    %385 = vsyncpa [#allocation6], 1
    %386 = vsyncpa [#allocation4], 1

// kernel: tpu_custom_call.1
$region0: #{tpu_custom_call.1}
  #allocation0 [shape = 'u32[]', space=smem, size = 0x4, offset = 0x4, fixed_abs, tag = 'smem constant byte address 0x4 - core index']
  #allocation1 [shape = 'u32[144,128]{1,0:T(1,128)}', space=vmem, size = 0x12000, scoped, tag = 'internal scratch']
  %s0 = inlined_call_operand.hbm [shape: f32[8,32], index: 0, kind: input, shape index: {}]
  %s1 = inlined_call_operand.hbm [shape: f32[8,32], index: 1, kind: input, shape index: {}]
  %s2 = inlined_call_operand.vmem [shape: f32[1,8], index: 2, kind: input, shape index: {}]
  %s3 = inlined_call_operand.hbm [shape: f32[8,32], index: 3, kind: output, shape index: {}]
  %s4 = sld [smem:[#allocation0]]
  $region30: #{tpu_custom_call.1} parent=0
    _
  %s6 = ssub.s32 1, %s4
  %s7 = scalar_select 0, %s6, %s4
  $region1: #{tpu_custom_call.1} parent=0
    #allocation2 [shape = 'u8[4096]{0}', space=vmem, size = 0x1000, scoped, tag = 'input window, operand 0, single buffered']
    #allocation3 [shape = 's32[1]{0}', space=sflag, size = 0x4, scoped, tag = 'scoped memory for tpu_custom_call.1']
    #allocation4 [shape = 's32[1]{0}', space=sflag, size = 0x4, scoped, tag = 'scoped memory for tpu_custom_call.1']
    #allocation5 [shape = 'u8[4096]{0}', space=vmem, size = 0x1000, scoped, tag = 'input window, operand 1, single buffered']
    #allocation6 [shape = 's32[1]{0}', space=sflag, size = 0x4, scoped, tag = 'scoped memory for tpu_custom_call.1']
    #allocation7 [shape = 'u8[4096]{0}', space=vmem, size = 0x1000, scoped, tag = 'output window, operand 0, single buffered']
    %8 = vsyncpa [#allocation3], 0
    %9 = vsyncpa [#allocation6], 0
    %10 = vsyncpa [#allocation4], 0
    // Predicated region
    $region2: #{tpu_custom_call.1} parent=1 // pred_check
      _
    $region3: #{tpu_custom_call.1} parent=1 // pred_check_branch
      %12 = sbr.rel (0) target = $region5
    $region4: #{tpu_custom_call.1} parent=1 // pred_region
      %s14 = ssub.s32 128, 128
      %15 = vsyncadd [#allocation3], %s14
      %s17 = sshll.u32 [#allocation2], 4
      %s18 = int_to_ptr.vmem [resolvable:$true] %s17
      %20 = dma.hbm_to_vmem [thread:$0]  %s0, 128, %s18, [#allocation3]
    $region5: #{tpu_custom_call.1} parent=1 // pred_fallthru
      _
    // Predicated region
    $region6: #{tpu_custom_call.1} parent=1 // pred_check
      _
    $region7: #{tpu_custom_call.1} parent=1 // pred_check_branch
      %22 = sbr.rel (0) target = $region9
    $region8: #{tpu_custom_call.1} parent=1 // pred_region
      %s24 = ssub.s32 128, 128
      %25 = vsyncadd [#allocation6], %s24
      %s27 = sshll.u32 [#allocation5], 4
      %s28 = int_to_ptr.vmem [resolvable:$true] %s27
      %30 = dma.hbm_to_vmem [thread:$0]  %s1, 128, %s28, [#allocation6]
    $region9: #{tpu_custom_call.1} parent=1 // pred_fallthru
      _
    // Predicated region
    $region10: #{tpu_custom_call.1} parent=1 // pred_check
      _
    $region11: #{tpu_custom_call.1} parent=1 // pred_check_branch
      %32 = sbr.rel (0) target = $region13
    $region12: #{tpu_custom_call.1} parent=1 // pred_region
      _
    $region13: #{tpu_custom_call.1} parent=1 // pred_fallthru
      _
    // Predicated region
    $region14: #{tpu_custom_call.1} parent=1 // pred_check
      _
    $region15: #{tpu_custom_call.1} parent=1 // pred_check_branch
      %34 = sbr.rel (0) target = $region17
    $region16: #{tpu_custom_call.1} parent=1 // pred_region
      %35 = dma.done [#allocation3], 128
    $region17: #{tpu_custom_call.1} parent=1 // pred_fallthru
      _
    // Predicated region
    $region18: #{tpu_custom_call.1} parent=1 // pred_check
      _
    $region19: #{tpu_custom_call.1} parent=1 // pred_check_branch
      %37 = sbr.rel (0) target = $region21
    $region20: #{tpu_custom_call.1} parent=1 // pred_region
      %38 = dma.done [#allocation6], 128
    $region21: #{tpu_custom_call.1} parent=1 // pred_fallthru
      _
    %s39 = smul.u32 0, 8
    %v40 = vld [vmem:[#allocation2] sm:$0xff]
    %v41 = vld [vmem:[#allocation5] sm:$0xff]
    %s42 = scalar_lea.vmem [#allocation5], %s39
    %v43 = vld [vmem:[%s42] sm:$0xff]
    %vm44 = vcmask 261120
    %v46 = vsel %vm44, %v40, 0
    %v49 = vsel %vm44, %v41, 0
    %51 = vmatprep.subr.mxu0 0.0
    %52 = vmatpush1.xpose.msra.mxu0 0.0
    %53 = vmatprep.subr.mxu0 0.0
    %54 = vmatpush1.xpose.msra.mxu0 0.0
    %55 = vmatprep.subr.mxu0 0.0
    %56 = vmatpush1.xpose.msra.mxu0 0.0
    %57 = vmatprep.subr.mxu0 0.0
    %58 = vmatpush1.xpose.msra.mxu0 0.0
    %59 = vmatprep.subr.mxu0 0.0
    %60 = vmatpush1.xpose.msra.mxu0 0.0
    %61 = vmatprep.subr.mxu0 0.0
    %62 = vmatpush1.xpose.msra.mxu0 0.0
    %63 = vmatprep.subr.mxu0 0.0
    %64 = vmatpush1.xpose.msra.mxu0 0.0
    %65 = vmatprep.subr.mxu0 0.0
    %66 = vmatpush1.xpose.msra.mxu0 0.0
    %67 = vmatprep.subr.mxu0 0.0
    %68 = vmatpush1.xpose.msra.mxu0 0.0
    %69 = vmatprep.subr.mxu0 0.0
    %70 = vmatpush1.xpose.msra.mxu0 0.0
    %71 = vmatprep.subr.mxu0 0.0
    %72 = vmatpush1.xpose.msra.mxu0 0.0
    %73 = vmatprep.subr.mxu0 0.0
    %74 = vmatpush1.xpose.msra.mxu0 0.0
    %75 = vmatprep.subr.mxu0 0.0
    %76 = vmatpush1.xpose.msra.mxu0 0.0
    %77 = vmatprep.subr.mxu0 0.0
    %78 = vmatpush1.xpose.msra.mxu0 0.0
    %79 = vmatprep.subr.mxu0 0.0
    %80 = vmatpush1.xpose.msra.mxu0 0.0
    %81 = vmatprep.subr.mxu0 0.0
    %82 = vmatpush1.xpose.msra.mxu0 %v49
    %83 = vmatprep.subr.mxu0 0.0
    %84 = vmatpush2.xpose.msra.mxu0 0.0
    %85 = vmatprep.subr.mxu0 0.0
    %86 = vmatpush2.xpose.msra.mxu0 0.0
    %87 = vmatprep.subr.mxu0 0.0
    %88 = vmatpush2.xpose.msra.mxu0 0.0
    %89 = vmatprep.subr.mxu0 0.0
    %90 = vmatpush2.xpose.msra.mxu0 0.0
    %91 = vmatprep.subr.mxu0 0.0
    %92 = vmatpush2.xpose.msra.mxu0 0.0
    %93 = vmatprep.subr.mxu0 0.0
    %94 = vmatpush2.xpose.msra.mxu0 0.0
    %95 = vmatprep.subr.mxu0 0.0
    %96 = vmatpush2.xpose.msra.mxu0 0.0
    %97 = vmatprep.subr.mxu0 0.0
    %98 = vmatpush2.xpose.msra.mxu0 0.0
    %99 = vmatprep.subr.mxu0 0.0
    %100 = vmatpush2.xpose.msra.mxu0 0.0
    %101 = vmatprep.subr.mxu0 0.0
    %102 = vmatpush2.xpose.msra.mxu0 0.0
    %103 = vmatprep.subr.mxu0 0.0
    %104 = vmatpush2.xpose.msra.mxu0 0.0
    %105 = vmatprep.subr.mxu0 0.0
    %106 = vmatpush2.xpose.msra.mxu0 0.0
    %107 = vmatprep.subr.mxu0 0.0
    %108 = vmatpush2.xpose.msra.mxu0 0.0
    %109 = vmatprep.subr.mxu0 0.0
    %110 = vmatpush2.xpose.msra.mxu0 0.0
    %111 = vmatprep.subr.mxu0 0.0
    %112 = vmatpush2.xpose.msra.mxu0 0.0
    %113 = vmatprep.subr.mxu0 0.0
    %114 = vmatpush2.xpose.msra.mxu0 0.0
    %115 = vmatprep.mubr.f32.mxu0 0.0
    %116 = vmatmul.mubr.f32.gmra.mxu0 %v46
    %v117 = vpop.f32.mrf.mxu0
    %v118 = vadd.f32 0.0, %v117
    %v119 = vpop.f32.mrf.mxu0
    %120 = vdwg.mxu0
    %v121 = vmul.f32 %v40, %v40
    %v122 = vsel %vm44, %v121, 0.0
    %123 = vadd.xlane.f32.xlu0 %v122
    %v124 = vpop.xlane.xlu0 %123
    %v125 = vld [vmem:[%s2] sm:$0x1]
    %v127 = vlaneseq
    %v128 = vshrl.u32 %v127, 7
    %v129 = vsub.s32 0, %v128
    %v130 = vrot.slane %v125, %v129
    %v132 = vadd.f32 %v124, %v130
    %v133 = vmul.f32 %v118, 2.0
    %v134 = vsub.f32 %v132, %v133
    %v135 = vmax.f32 %v134, 0.0
    %v136 = vrsqrt.pop %v135
    %v137 = vmul.f32 %v135, %v136
    %vm138 = vcmp.eq.f32.partialorder %v135, inf
    %v139 = vsel %vm138, %v135, %v137
    %vm140 = vcmp.eq.f32.partialorder %v135, 0.0
    %v141 = vand.u32 %v135, 2147483648
    %v142 = vsel %vm140, %v141, %v139
    %v143 = vsub.f32 %v40, %v43
    %v144 = vmul.f32 %v143, %v143
    %v145 = vsel %vm44, %v144, 0.0
    %146 = vadd.xlane.f32.xlu0 %v145
    %v147 = vpop.xlane.xlu0 %146
    %v148 = vrsqrt.pop %v147
    %v149 = vmul.f32 %v147, %v148
    %vm150 = vcmp.eq.f32.partialorder %v147, inf
    %v151 = vsel %vm150, %v147, %v149
    %vm152 = vcmp.eq.f32.partialorder %v147, 0.0
    %v153 = vand.u32 %v147, 2147483648
    %v154 = vsel %vm152, %v153, %v151
    %v155 = vlaneseq
    %v156 = vand.u32 %v155, 127
    %v157 = vlaneseq
    %v158 = vshrl.u32 %v157, 7
    %v159 = vstv %s39
    %v160 = vadd.s32 %v158, %v159
    %vm161 = vcmp.eq.s32.totalorder %v156, %v160
    %v162 = vsel %vm161, inf, %v142
    %v163 = vsub.f32 %v162, %v154
    %v164 = vand.u32 2147483647, %v163
    %vm165 = vcmask 64512
    %v166 = vsel %vm165, %v164, inf
    %167 = vmin.xlane.f32.xlu0 %v166
    %v168 = vpop.xlane.xlu0 %167
    %vm169 = vcmp.eq.f32.partialorder %v164, %v168
    %v170 = vsel %vm169, %v156, 8
    %v171 = vsel %vm165, %v170, 2147483647
    %v172 = vand.u32 %v171, 65535
    %v173 = vshra.s32 %v171, 16
    %v174 = vcvt.s32.f32 %v172
    %v175 = vcvt.s32.f32 %v173
    %176 = vmin.xlane.f32.xlu0 %v175
    %v177 = vpop.xlane.xlu0 %176
    %vm178 = vcmp.eq.f32.partialorder %v175, %v177
    %v179 = vsel %vm178, %v174, inf
    %180 = vmin.xlane.f32.xlu0 %v179
    %v181 = vpop.xlane.xlu0 %180
    %v182 = vcvt.f32.s32 %v181
    %v183 = vcvt.f32.s32 %v177
    %v184 = vshll.u32 %v183, 16
    %v185 = vadd.s32 %v184, %v182
    %v186 = vsel %vm161, -1.0, %v142
    %188 = vset.pattern.permute.xlu0 0
    %189 = vperm.xlu0 %188, %v186
    %v190 = vpop.permute.xlu0 %189
    %vm192 = vcmp.gt.f32.partialorder %v190, %v186
    %vm193 = vcmp.eq.f32.partialorder %v190, %v186
    %vm194 = vcmp.gt.s32.totalorder %v156, 0
    %vm195 = vmand %vm193, %vm194
    %vm196 = vmor %vm192, %vm195
    %v197 = vsel %vm196, 1, 0
    %198 = vset.pattern.permute.xlu0 1
    %199 = vperm.xlu0 %198, %v186
    %v200 = vpop.permute.xlu0 %199
    %vm202 = vcmp.gt.f32.partialorder %v200, %v186
    %vm203 = vcmp.eq.f32.partialorder %v200, %v186
    %vm204 = vcmp.gt.s32.totalorder %v156, 1
    %vm205 = vmand %vm203, %vm204
    %vm206 = vmor %vm202, %vm205
    %v207 = vsel %vm206, 1, 0
    %v208 = vadd.s32 %v197, %v207
    %209 = vset.pattern.permute.xlu0 2
    %210 = vperm.xlu0 %209, %v186
    %v211 = vpop.permute.xlu0 %210
    %vm213 = vcmp.gt.f32.partialorder %v211, %v186
    %vm214 = vcmp.eq.f32.partialorder %v211, %v186
    %vm215 = vcmp.gt.s32.totalorder %v156, 2
    %vm216 = vmand %vm214, %vm215
    %vm217 = vmor %vm213, %vm216
    %v218 = vsel %vm217, 1, 0
    %v219 = vadd.s32 %v208, %v218
    %220 = vset.pattern.permute.xlu0 3
    %221 = vperm.xlu0 %220, %v186
    %v222 = vpop.permute.xlu0 %221
    %vm224 = vcmp.gt.f32.partialorder %v222, %v186
    %vm225 = vcmp.eq.f32.partialorder %v222, %v186
    %vm226 = vcmp.gt.s32.totalorder %v156, 3
    %vm227 = vmand %vm225, %vm226
    %vm228 = vmor %vm224, %vm227
    %v229 = vsel %vm228, 1, 0
    %v230 = vadd.s32 %v219, %v229
    %231 = vset.pattern.permute.xlu0 4
    %232 = vperm.xlu0 %231, %v186
    %v233 = vpop.permute.xlu0 %232
    %vm235 = vcmp.gt.f32.partialorder %v233, %v186
    %vm236 = vcmp.eq.f32.partialorder %v233, %v186
    %vm237 = vcmp.gt.s32.totalorder %v156, 4
    %vm238 = vmand %vm236, %vm237
    %vm239 = vmor %vm235, %vm238
    %v240 = vsel %vm239, 1, 0
    %v241 = vadd.s32 %v230, %v240
    %242 = vset.pattern.permute.xlu0 5
    %243 = vperm.xlu0 %242, %v186
    %v244 = vpop.permute.xlu0 %243
    %vm246 = vcmp.gt.f32.partialorder %v244, %v186
    %vm247 = vcmp.eq.f32.partialorder %v244, %v186
    %vm248 = vcmp.gt.s32.totalorder %v156, 5
    %vm249 = vmand %vm247, %vm248
    %vm250 = vmor %vm246, %vm249
    %v251 = vsel %vm250, 1, 0
    %v252 = vadd.s32 %v241, %v251
    %253 = vset.pattern.permute.xlu0 6
    %254 = vperm.xlu0 %253, %v186
    %v255 = vpop.permute.xlu0 %254
    %vm257 = vcmp.gt.f32.partialorder %v255, %v186
    %vm258 = vcmp.eq.f32.partialorder %v255, %v186
    %vm259 = vcmp.gt.s32.totalorder %v156, 6
    %vm260 = vmand %vm258, %vm259
    %vm261 = vmor %vm257, %vm260
    %v262 = vsel %vm261, 1, 0
    %v263 = vadd.s32 %v252, %v262
    %264 = vset.pattern.permute.xlu0 7
    %265 = vperm.xlu0 %264, %v186
    %v266 = vpop.permute.xlu0 %265
    %vm268 = vcmp.gt.f32.partialorder %v266, %v186
    %vm269 = vcmp.eq.f32.partialorder %v266, %v186
    %vm270 = vcmp.gt.s32.totalorder %v156, 7
    %vm271 = vmand %vm269, %vm270
    %vm272 = vmor %vm268, %vm271
    %v273 = vsel %vm272, 1, 0
    %v274 = vadd.s32 %v263, %v273
    %vm275 = vcmp.eq.s32.totalorder %v274, 3
    %v276 = vsel %vm275, %v156, 8
    %v277 = vsel %vm165, %v276, 2147483647
    %v278 = vand.u32 %v277, 65535
    %v279 = vshra.s32 %v277, 16
    %v280 = vcvt.s32.f32 %v278
    %v281 = vcvt.s32.f32 %v279
    %282 = vmin.xlane.f32.xlu0 %v281
    %v283 = vpop.xlane.xlu0 %282
    %vm284 = vcmp.eq.f32.partialorder %v281, %v283
    %v285 = vsel %vm284, %v280, inf
    %286 = vmin.xlane.f32.xlu0 %v285
    %v287 = vpop.xlane.xlu0 %286
    %v288 = vcvt.f32.s32 %v287
    %v289 = vcvt.f32.s32 %v283
    %v290 = vshll.u32 %v289, 16
    %v291 = vadd.s32 %v290, %v288
    %vm292 = vcmp.lt.s32.totalorder %v185, %v291
    %v293 = vsel %vm292, %v185, %v291
    %vm294 = vcmp.eq.s32.totalorder %v156, %v293
    %v295 = vsel %vm294, 1, 0
    %v296 = vcvt.s32.f32 %v295
    %v298 = vsel %vm165, %v296, 0
    %300 = vmatprep.subr.mxu0 0.0
    %301 = vmatpush1.msra.mxu0 0.0
    %302 = vmatprep.subr.mxu0 0.0
    %303 = vmatpush1.msra.mxu0 0.0
    %304 = vmatprep.subr.mxu0 0.0
    %305 = vmatpush1.msra.mxu0 0.0
    %306 = vmatprep.subr.mxu0 0.0
    %307 = vmatpush1.msra.mxu0 0.0
    %308 = vmatprep.subr.mxu0 0.0
    %309 = vmatpush1.msra.mxu0 0.0
    %310 = vmatprep.subr.mxu0 0.0
    %311 = vmatpush1.msra.mxu0 0.0
    %312 = vmatprep.subr.mxu0 0.0
    %313 = vmatpush1.msra.mxu0 0.0
    %314 = vmatprep.subr.mxu0 0.0
    %315 = vmatpush1.msra.mxu0 0.0
    %316 = vmatprep.subr.mxu0 0.0
    %317 = vmatpush1.msra.mxu0 0.0
    %318 = vmatprep.subr.mxu0 0.0
    %319 = vmatpush1.msra.mxu0 0.0
    %320 = vmatprep.subr.mxu0 0.0
    %321 = vmatpush1.msra.mxu0 0.0
    %322 = vmatprep.subr.mxu0 0.0
    %323 = vmatpush1.msra.mxu0 0.0
    %324 = vmatprep.subr.mxu0 0.0
    %325 = vmatpush1.msra.mxu0 0.0
    %326 = vmatprep.subr.mxu0 0.0
    %327 = vmatpush1.msra.mxu0 0.0
    %328 = vmatprep.subr.mxu0 0.0
    %329 = vmatpush1.msra.mxu0 0.0
    %330 = vmatprep.subr.mxu0 0.0
    %331 = vmatpush1.msra.mxu0 %v41
    %332 = vmatprep.subr.mxu0 0.0
    %333 = vmatpush2.msra.mxu0 0.0
    %334 = vmatprep.subr.mxu0 0.0
    %335 = vmatpush2.msra.mxu0 0.0
    %336 = vmatprep.subr.mxu0 0.0
    %337 = vmatpush2.msra.mxu0 0.0
    %338 = vmatprep.subr.mxu0 0.0
    %339 = vmatpush2.msra.mxu0 0.0
    %340 = vmatprep.subr.mxu0 0.0
    %341 = vmatpush2.msra.mxu0 0.0
    %342 = vmatprep.subr.mxu0 0.0
    %343 = vmatpush2.msra.mxu0 0.0
    %344 = vmatprep.subr.mxu0 0.0
    %345 = vmatpush2.msra.mxu0 0.0
    %346 = vmatprep.subr.mxu0 0.0
    %347 = vmatpush2.msra.mxu0 0.0
    %348 = vmatprep.subr.mxu0 0.0
    %349 = vmatpush2.msra.mxu0 0.0
    %350 = vmatprep.subr.mxu0 0.0
    %351 = vmatpush2.msra.mxu0 0.0
    %352 = vmatprep.subr.mxu0 0.0
    %353 = vmatpush2.msra.mxu0 0.0
    %354 = vmatprep.subr.mxu0 0.0
    %355 = vmatpush2.msra.mxu0 0.0
    %356 = vmatprep.subr.mxu0 0.0
    %357 = vmatpush2.msra.mxu0 0.0
    %358 = vmatprep.subr.mxu0 0.0
    %359 = vmatpush2.msra.mxu0 0.0
    %360 = vmatprep.subr.mxu0 0.0
    %361 = vmatpush2.msra.mxu0 0.0
    %362 = vmatprep.subr.mxu0 0.0
    %363 = vmatpush2.msra.mxu0 0.0
    %364 = vmatprep.mubr.f32.mxu0 0.0
    %365 = vmatmul.mubr.f32.gmra.mxu0 %v298
    %v366 = vpop.f32.mrf.mxu0
    %v367 = vadd.f32 0.0, %v366
    %v368 = vpop.f32.mrf.mxu0
    %369 = vdwg.mxu0
    %370 = vst.msk [vmem:[#allocation7] sm:$0xff] %vm44, %v367
    // Predicated region
    $region22: #{tpu_custom_call.1} parent=1 // pred_check
      _
    $region23: #{tpu_custom_call.1} parent=1 // pred_check_branch
      %372 = sbr.rel (0) target = $region25
    $region24: #{tpu_custom_call.1} parent=1 // pred_region
      %s374 = ssub.s32 128, 128
      %375 = vsyncadd [#allocation4], %s374
      %s377 = sshll.u32 [#allocation7], 4
      %s378 = int_to_ptr.vmem [resolvable:$true] %s377
      %380 = dma.vmem_to_hbm [thread:$0]  %s378, 128, %s3, [#allocation4]
    $region25: #{tpu_custom_call.1} parent=1 // pred_fallthru
      _
    // Predicated region
    $region26: #{tpu_custom_call.1} parent=1 // pred_check
      _
    $region27: #{tpu_custom_call.1} parent=1 // pred_check_branch
      %382 = sbr.rel (0) target = $region29
    $region28: #{tpu_custom_call.1} parent=1 // pred_region
      %383 = dma.done [#allocation4], 128
    $region29: #{tpu_custom_call.1} parent=1 // pred_fallthru
      _
    %384 = vsyncpa [#allocation3], 1
    %385 = vsyncpa [#allocation6], 1
    %386 = vsyncpa [#allocation4], 1

</llo_original>
